<compile_context>
chip_gen: v5e
topology: v5e:2x2
jax: 0.10.0
libtpu: 0.0.40
codegen_flags: <defaults>
</compile_context>

<pallas_src>
import functools

import jax
import jax.numpy as jnp
import numpy as np
from jax import lax
from jax.experimental import pallas as pl
from jax.experimental.pallas import tpu as pltpu


# ----------------------------------------------------------------------------
# Kernels
# ----------------------------------------------------------------------------

def _proj_kernel(x_ref, wqv_ref, bqv_ref, wk_ref, bk_ref, qv_ref, k_ref):
    """Fused 1x1 convs over one pixel tile.

    qv = [Wq; Wv; 0] @ x + [bq; bv; 1]   (the ones row later becomes the
    softmax denominator);  k = Wk @ x + bk.  Outputs are stored in dot_dtype.
    """
    x = x_ref[0].astype(wqv_ref.dtype)                                  # (C, tn)
    qv = jnp.dot(wqv_ref[...], x,
                 preferred_element_type=jnp.float32) + bqv_ref[...]     # (Cr+C+1, tn)
    k = jnp.dot(wk_ref[...], x,
                preferred_element_type=jnp.float32) + bk_ref[...]       # (Cr, tn)
    qv_ref[0] = qv.astype(qv_ref.dtype)
    k_ref[0] = k.astype(k_ref.dtype)


def _attention_kernel(qv_ref, k_ref, x_ref, gamma_ref, o_ref, *,
                      cr, exp_dtype, approx_recip):
    """One (batch, output-pixel tile) step of the attention."""
    c = x_ref.shape[1]                         # channels
    q = qv_ref[0, :cr, :]                      # (Cr, N)   queries, full pixel axis
    v_aug = qv_ref[0, cr:cr + c + 1, :]        # (C+1, N)  values + ones row
    k_t = k_ref[0]                             # (Cr, tj)  keys for this tile

    # corr[jj, i] = sum_r k[r, j0+jj] * q[r, i] == correlations[i, j0+jj],
    # so torch.softmax(correlations, dim=1) is a softmax over the LANE axis.
    corr = lax.dot_general(k_t, q, (((0,), (0,)), ((), ())),
                           preferred_element_type=jnp.float32)          # (tj, N)
    m = jnp.max(corr, axis=-1, keepdims=True)                           # (tj, 1)
    e = jnp.exp((corr - m).astype(exp_dtype))                           # (tj, N)

    # acc[c, jj] = sum_i v_aug[c, i] * e[jj, i]; row C is the softmax denom.
    acc = lax.dot_general(v_aug, e.astype(v_aug.dtype),
                          (((1,), (1,)), ((), ())),
                          preferred_element_type=jnp.float32)           # (C+1, tj)
    num = acc[:c, :]
    den = acc[c:, :]
    if approx_recip:
        attn = num * pl.reciprocal(den, approx=True)                    # (C, tj)
    else:
        attn = num / den

    x_res = x_ref[0].astype(jnp.float32)                                # (C, tj)
    o_ref[0] = (gamma_ref[0] * attn + x_res).astype(o_ref.dtype)        # lane-dense


# ----------------------------------------------------------------------------
# Wrapper
# ----------------------------------------------------------------------------

def _pick_tile_and_vmem(N, C, Cr, xsize, dsize, esize, block_j):
    """Generation-aware output-pixel tile size and VMEM limit."""
    try:
        vmem_cap = int(pltpu.get_tpu_info().vmem_capacity_bytes)
    except Exception:
        vmem_cap = 64 * 2**20           # conservative fallback (v7x per-core VMEM)
    cq = Cr + C + 1

    def footprint(tj):
        blocks = (2 * cq * N * dsize        # q / v_aug block (double buffered)
                  + 2 * Cr * tj * dsize     # k tile
                  + 2 * C * tj * xsize      # residual tile
                  + 2 * C * tj * xsize)     # output tile
        temps = (tj * N * 4                 # corr (f32)
                 + tj * N * esize           # e
                 + 8 * (C + 1) * tj)        # acc / attn
        return blocks + temps

    if block_j is not None:
        tj = int(block_j)
    elif N % 128 != 0:
        tj = N
    else:
        budget = int(vmem_cap * 0.45)       # leave >half of VMEM as headroom
        cands = [t for t in (1024, 512, 256, 128) if t <= N and N % t == 0]
        tj = next((t for t in cands if footprint(t) <= budget), cands[-1])
    assert N % tj == 0 and (tj == N or tj % 128 == 0), (N, tj)

    vmem_limit = int(min(int(vmem_cap * 0.9),
                         max(32 * 2**20, 2 * footprint(tj))))
    return tj, vmem_limit


def attention_conv2d(x_nchw, wq, bq, wk, bk, wv, bv, gamma, *,
                     dot_dtype=jnp.bfloat16, exp_dtype=None, block_j=None):
    """x_nchw: (B, C, H, W). Conv weights in PyTorch layout: wq/wk (Cr, C),
    wv (C, C); biases 1-D; gamma (1,)."""
    B, C, H, W = x_nchw.shape
    N = H * W
    Cr = wq.shape[0]
    Cq = Cr + C + 1
    f32 = jnp.float32

    if exp_dtype is None:
        # TODO(synk): select f32 automatically on v5e (no bf16 EUP/VPU path).
        exp_dtype = dot_dtype
    approx_recip = (jnp.dtype(dot_dtype) != jnp.dtype(jnp.float32))

    xsize = x_nchw.dtype.itemsize
    dsize = jnp.dtype(dot_dtype).itemsize
    esize = jnp.dtype(exp_dtype).itemsize
    tj, vmem_limit = _pick_tile_and_vmem(N, C, Cr, xsize, dsize, esize, block_j)
    ntj = N // tj

    x_cn = x_nchw.reshape(B, C, N)          # free: NCHW is already (B, C, N)

    # Fused [Wq; Wv; 0] weight / [bq; bv; 1] bias (ones row -> softmax denom).
    w_qv = jnp.concatenate(
        [wq, wv, jnp.zeros((1, C), wq.dtype)], axis=0).astype(dot_dtype)   # (Cq, C)
    b_qv = jnp.concatenate(
        [bq, bv, jnp.ones((1,), bq.dtype)], axis=0).astype(f32).reshape(Cq, 1)
    w_k = wk.astype(dot_dtype)                                             # (Cr, C)
    b_k = bk.astype(f32).reshape(Cr, 1)
    gamma32 = gamma.astype(f32)

    # --- 1) Per-batch projection: q, v+ones, k — one MXU pass over x. ------
    proj_cost = pl.CostEstimate(
        flops=int(B * 2 * (Cq + Cr) * C * N),
        transcendentals=0,
        bytes_accessed=int(B * C * N * xsize + B * (Cq + Cr) * N * dsize
                           + (Cq + Cr) * C * dsize + (Cq + Cr) * 4))
    qv_aug, k_proj = pl.pallas_call(
        _proj_kernel,
        out_shape=(jax.ShapeDtypeStruct((B, Cq, N), dot_dtype),
                   jax.ShapeDtypeStruct((B, Cr, N), dot_dtype)),
        grid_spec=pltpu.PrefetchScalarGridSpec(
            num_scalar_prefetch=0,
            grid=(B, ntj),
            in_specs=[
                pl.BlockSpec((1, C, tj), lambda b, n: (b, 0, n)),   # x tile
                pl.BlockSpec((Cq, C), lambda b, n: (0, 0)),         # [Wq; Wv; 0]
                pl.BlockSpec((Cq, 1), lambda b, n: (0, 0)),         # [bq; bv; 1]
                pl.BlockSpec((Cr, C), lambda b, n: (0, 0)),         # Wk
                pl.BlockSpec((Cr, 1), lambda b, n: (0, 0)),         # bk
            ],
            out_specs=[
                pl.BlockSpec((1, Cq, tj), lambda b, n: (b, 0, n)),
                pl.BlockSpec((1, Cr, tj), lambda b, n: (b, 0, n)),
            ]),
        compiler_params=pltpu.CompilerParams(
            dimension_semantics=("parallel", "parallel"),
            vmem_limit_bytes=vmem_limit),
        cost_estimate=proj_cost,
    )(x_cn, w_qv, b_qv, w_k, b_k)

    # --- 2) Attention over output-pixel tiles. -----------------------------
    attn_cost = pl.CostEstimate(
        flops=int(B * 2 * N * N * (Cr + C + 1)),
        transcendentals=int(B * N * N),
        bytes_accessed=int(B * Cq * N * dsize       # q/v_aug once per batch
                           + B * Cr * N * dsize     # k tiles
                           + 2 * B * C * N * xsize))  # residual in + out
    kernel = functools.partial(_attention_kernel, cr=Cr,
                               exp_dtype=exp_dtype, approx_recip=approx_recip)
    out = pl.pallas_call(
        kernel,
        out_shape=jax.ShapeDtypeStruct((B, C, N), x_nchw.dtype),
        grid_spec=pltpu.PrefetchScalarGridSpec(
            num_scalar_prefetch=0,
            grid=(B, ntj),
            in_specs=[
                pl.BlockSpec((1, Cq, N), lambda b, j: (b, 0, 0)),   # q + v_aug (per-batch)
                pl.BlockSpec((1, Cr, tj), lambda b, j: (b, 0, j)),  # k tile
                pl.BlockSpec((1, C, tj), lambda b, j: (b, 0, j)),   # residual tile
                pl.BlockSpec(memory_space=pltpu.MemorySpace.SMEM),  # gamma scalar
            ],
            out_specs=pl.BlockSpec((1, C, tj), lambda b, j: (b, 0, j)),
        ),
        compiler_params=pltpu.CompilerParams(
            dimension_semantics=("parallel", "parallel"),
            vmem_limit_bytes=vmem_limit),
        cost_estimate=attn_cost,
    )(qv_aug, k_proj, x_cn, gamma32)

    return out.reshape(B, C, H, W)             # free reshape back to NCHW


# ----------------------------------------------------------------------------
# Pure-JAX reference (matches the PyTorch forward) and param init
# ----------------------------------------------------------------------------

def reference(x_nchw, wq, bq, wk, bk, wv, bv, gamma):
    B, C, H, W = x_nchw.shape
    N = H * W
    hi = jax.lax.Precision.HIGHEST
    xf = x_nchw.reshape(B, C, N)
    q = jnp.einsum('rc,bcn->brn', wq, xf, precision=hi) + bq.reshape(1, -1, 1)
    k = jnp.einsum('rc,bcn->brn', wk, xf, precision=hi) + bk.reshape(1, -1, 1)
    v = jnp.einsum('oc,bcn->bon', wv, xf, precision=hi) + bv.reshape(1, -1, 1)
    corr = jnp.einsum('bri,brj->bij', q, k, precision=hi)           # (B, N, N)
    beta = jax.nn.softmax(corr, axis=1)                             # softmax over i
    attn = gamma[0] * jnp.einsum('bci,bij->bcj', v, beta, precision=hi)
    return attn.reshape(B, C, H, W) + x_nchw


def init_params(key, in_channels, reduction_ratio):
    """Parameters in PyTorch Conv2d layout: W (C_out, C_in), b (C_out,)."""
    cr = int(in_channels // reduction_ratio)
    ks = jax.random.split(key, 6)

    def conv_init(kw, kb, c_out, c_in):
        bound = 1.0 / np.sqrt(c_in)
        w = jax.random.uniform(kw, (c_out, c_in), jnp.float32, -bound, bound)
        b = jax.random.uniform(kb, (c_out,), jnp.float32, -bound, bound)
        return w, b

    wq, bq = conv_init(ks[0], ks[1], cr, in_channels)
    wk, bk = conv_init(ks[2], ks[3], cr, in_channels)
    wv, bv = conv_init(ks[4], ks[5], in_channels, in_channels)
    gamma = jnp.zeros((1,), jnp.float32)       # module init: gamma = 0.0
    return wq, bq, wk, bk, wv, bv, gamma


if __name__ == "__main__":
    # Small, layout-friendly shapes: C=16, reduction 2 -> Cr=8, N=256.
    B, C, H, W = 2, 16, 16, 16
    reduction_ratio = 2.0

    key = jax.random.PRNGKey(0)
    kx, kp = jax.random.split(key)
    x = jax.random.normal(kx, (B, C, H, W), jnp.float32)
    wq, bq, wk, bk, wv, bv, gamma0 = init_params(kp, C, reduction_ratio)

    # 1) Module init (gamma = 0): output must equal the input.
    out0 = attention_conv2d(x, wq, bq, wk, bk, wv, bv, gamma0,
                            dot_dtype=jnp.float32)
    jax.block_until_ready(out0)
    np.testing.assert_allclose(np.asarray(out0), np.asarray(x),
                               rtol=1e-6, atol=1e-6)

    # 2) Non-zero gamma, f32 operands + exact reciprocal, vs pure-JAX reference.
    gamma_nz = jnp.array([0.5], jnp.float32)
    ref = reference(x, wq, bq, wk, bk, wv, bv, gamma_nz)
    out_f32 = attention_conv2d(x, wq, bq, wk, bk, wv, bv, gamma_nz,
                               dot_dtype=jnp.float32)
    jax.block_until_ready(out_f32)
    np.testing.assert_allclose(np.asarray(out_f32), np.asarray(ref),
                               rtol=2e-2, atol=2e-2)

    # 3) Default perf config (v6e/v7x): bf16 matmul operands + bf16 exponent.
    out_bf16 = attention_conv2d(x, wq, bq, wk, bk, wv, bv, gamma_nz,
                                dot_dtype=jnp.bfloat16)
    jax.block_until_ready(out_bf16)
    np.testing.assert_allclose(np.asarray(out_bf16), np.asarray(ref),
                               rtol=8e-2, atol=8e-2)

    # 4) v5e-style config: bf16 matmuls but f32 softmax exponent.
    out_v5e = attention_conv2d(x, wq, bq, wk, bk, wv, bv, gamma_nz,
                               dot_dtype=jnp.bfloat16, exp_dtype=jnp.float32)
    jax.block_until_ready(out_v5e)
    np.testing.assert_allclose(np.asarray(out_v5e), np.asarray(ref),
                               rtol=8e-2, atol=8e-2)

    # 5) Exercise the tiled output-pixel path (grid = (B, 2), tj = 128).
    out_tiled = attention_conv2d(x, wq, bq, wk, bk, wv, bv, gamma_nz,
                                 dot_dtype=jnp.float32, block_j=128)
    jax.block_until_ready(out_tiled)
    np.testing.assert_allclose(np.asarray(out_tiled), np.asarray(out_f32),
                               rtol=1e-4, atol=1e-4)

    print("KERNEL_OK")
</pallas_src>

<mosaic_0001>
module attributes {stable_mosaic.version = 11 : i64} {
  func.func @_proj_kernel(%arg0: i32, %arg1: i32, %arg2: memref<1x16x256xf32, #tpu.memory_space<vmem>>, %arg3: memref<25x16xf32, #tpu.memory_space<vmem>>, %arg4: memref<25x1xf32, #tpu.memory_space<vmem>>, %arg5: memref<8x16xf32, #tpu.memory_space<vmem>>, %arg6: memref<8x1xf32, #tpu.memory_space<vmem>>, %arg7: memref<1x25x256xf32, #tpu.memory_space<vmem>>, %arg8: memref<1x8x256xf32, #tpu.memory_space<vmem>>) attributes {dimension_semantics = [#tpu.dimension_semantics<parallel>, #tpu.dimension_semantics<parallel>], iteration_bounds = array<i64: 2, 1>, scalar_prefetch = 0 : i64, scratch_operands = 0 : i64, tpu.core_type = #tpu.core_type<tc>, window_params = [{transform_indices = @transform_0, window_bounds = array<i64: 1, 16, 256>}, {pipeline_mode = #tpu.pipeline_mode<synchronous>, transform_indices = @transform_1, window_bounds = array<i64: 25, 16>}, {pipeline_mode = #tpu.pipeline_mode<synchronous>, transform_indices = @transform_2, window_bounds = array<i64: 25, 1>}, {pipeline_mode = #tpu.pipeline_mode<synchronous>, transform_indices = @transform_3, window_bounds = array<i64: 8, 16>}, {pipeline_mode = #tpu.pipeline_mode<synchronous>, transform_indices = @transform_4, window_bounds = array<i64: 8, 1>}, {transform_indices = @transform_5, window_bounds = array<i64: 1, 25, 256>}, {transform_indices = @transform_6, window_bounds = array<i64: 1, 8, 256>}]} {
    %c0 = arith.constant 0 : index
    %c0_0 = arith.constant 0 : index
    %c0_1 = arith.constant 0 : index
    %0 = vector.load %arg2[%c0, %c0_0, %c0_1] : memref<1x16x256xf32, #tpu.memory_space<vmem>>, vector<1x16x256xf32>
    %1 = vector.shape_cast %0 : vector<1x16x256xf32> to vector<16x256xf32>
    %c0_2 = arith.constant 0 : index
    %c0_3 = arith.constant 0 : index
    %2 = vector.load %arg3[%c0_2, %c0_3] : memref<25x16xf32, #tpu.memory_space<vmem>>, vector<25x16xf32>
    %cst = arith.constant dense<0.000000e+00> : vector<25x256xf32>
    %3 = tpu.matmul %2, %1, %cst {dimension_numbers = #tpu.dot_dimension_numbers<[1], [0], [0], [1], [0, 0, 1, 1], [], []>} : vector<25x16xf32>, vector<16x256xf32>, vector<25x256xf32> -> vector<25x256xf32>
    %c0_4 = arith.constant 0 : index
    %c0_5 = arith.constant 0 : index
    %4 = vector.load %arg4[%c0_4, %c0_5] : memref<25x1xf32, #tpu.memory_space<vmem>>, vector<25x1xf32>
    %5 = vector.broadcast %4 : vector<25x1xf32> to vector<25x256xf32>
    %6 = arith.addf %3, %5 : vector<25x256xf32>
    %c0_6 = arith.constant 0 : index
    %c0_7 = arith.constant 0 : index
    %7 = vector.load %arg5[%c0_6, %c0_7] : memref<8x16xf32, #tpu.memory_space<vmem>>, vector<8x16xf32>
    %cst_8 = arith.constant dense<0.000000e+00> : vector<8x256xf32>
    %8 = tpu.matmul %7, %1, %cst_8 {dimension_numbers = #tpu.dot_dimension_numbers<[1], [0], [0], [1], [0, 0, 1, 1], [], []>} : vector<8x16xf32>, vector<16x256xf32>, vector<8x256xf32> -> vector<8x256xf32>
    %c0_9 = arith.constant 0 : index
    %c0_10 = arith.constant 0 : index
    %9 = vector.load %arg6[%c0_9, %c0_10] : memref<8x1xf32, #tpu.memory_space<vmem>>, vector<8x1xf32>
    %10 = vector.broadcast %9 : vector<8x1xf32> to vector<8x256xf32>
    %11 = arith.addf %8, %10 : vector<8x256xf32>
    %c0_11 = arith.constant 0 : index
    %c0_12 = arith.constant 0 : index
    %c0_13 = arith.constant 0 : index
    %12 = vector.load %arg7[%c0_11, %c0_12, %c0_13] : memref<1x25x256xf32, #tpu.memory_space<vmem>>, vector<1x25x256xf32>
    %13 = vector.shape_cast %12 : vector<1x25x256xf32> to vector<25x256xf32>
    %14 = vector.shape_cast %6 : vector<25x256xf32> to vector<1x25x256xf32>
    tpu.vector_store %arg7[%c0_11, %c0_12, %c0_13], %14 {strides = array<i32>} : memref<1x25x256xf32, #tpu.memory_space<vmem>>, vector<1x25x256xf32>,
    %c0_14 = arith.constant 0 : index
    %c0_15 = arith.constant 0 : index
    %c0_16 = arith.constant 0 : index
    %15 = vector.load %arg8[%c0_14, %c0_15, %c0_16] : memref<1x8x256xf32, #tpu.memory_space<vmem>>, vector<1x8x256xf32>
    %16 = vector.shape_cast %15 : vector<1x8x256xf32> to vector<8x256xf32>
    %17 = vector.shape_cast %11 : vector<8x256xf32> to vector<1x8x256xf32>
    tpu.vector_store %arg8[%c0_14, %c0_15, %c0_16], %17 {strides = array<i32>} : memref<1x8x256xf32, #tpu.memory_space<vmem>>, vector<1x8x256xf32>,
    return
  }
  func.func @transform_0(%arg0: i32, %arg1: i32) -> (i32, i32, i32) {
    %c0_i32 = arith.constant 0 : i32
    %c0_i32_0 = arith.constant 0 : i32
    return %arg0, %c0_i32, %arg1 : i32, i32, i32
  }
  func.func @transform_1(%arg0: i32, %arg1: i32) -> (i32, i32) {
    %c0_i32 = arith.constant 0 : i32
    %c0_i32_0 = arith.constant 0 : i32
    %c0_i32_1 = arith.constant 0 : i32
    return %c0_i32, %c0_i32_0 : i32, i32
  }
  func.func @transform_2(%arg0: i32, %arg1: i32) -> (i32, i32) {
    %c0_i32 = arith.constant 0 : i32
    %c0_i32_0 = arith.constant 0 : i32
    %c0_i32_1 = arith.constant 0 : i32
    return %c0_i32, %c0_i32_0 : i32, i32
  }
  func.func @transform_3(%arg0: i32, %arg1: i32) -> (i32, i32) {
    %c0_i32 = arith.constant 0 : i32
    %c0_i32_0 = arith.constant 0 : i32
    %c0_i32_1 = arith.constant 0 : i32
    return %c0_i32, %c0_i32_0 : i32, i32
  }
  func.func @transform_4(%arg0: i32, %arg1: i32) -> (i32, i32) {
    %c0_i32 = arith.constant 0 : i32
    %c0_i32_0 = arith.constant 0 : i32
    %c0_i32_1 = arith.constant 0 : i32
    return %c0_i32, %c0_i32_0 : i32, i32
  }
  func.func @transform_5(%arg0: i32, %arg1: i32) -> (i32, i32, i32) {
    %c0_i32 = arith.constant 0 : i32
    %c0_i32_0 = arith.constant 0 : i32
    return %arg0, %c0_i32, %arg1 : i32, i32, i32
  }
  func.func @transform_6(%arg0: i32, %arg1: i32) -> (i32, i32, i32) {
    %c0_i32 = arith.constant 0 : i32
    %c0_i32_0 = arith.constant 0 : i32
    return %arg0, %c0_i32, %arg1 : i32, i32, i32
  }
}

</mosaic_0001>

<llo_original>
// kernel: tpu_custom_call.1
$region0: #{tpu_custom_call.1}
  #allocation0 [shape = 'u32[]', space=smem, size = 0x4, offset = 0x4, fixed_abs, tag = 'smem constant byte address 0x4 - core index']
  #allocation1 [shape = 'u32[72,128]{1,0:T(1,128)}', space=vmem, size = 0x9000, scoped, tag = 'internal scratch']
  %s0 = inlined_call_operand.vmem [shape: f32[2,16,256], index: 0, kind: input, shape index: {}]
  %s1 = inlined_call_operand.vmem [shape: f32[25,16], index: 1, kind: input, shape index: {}]
  %s2 = inlined_call_operand.vmem [shape: f32[25,1], index: 2, kind: input, shape index: {}]
  %s3 = inlined_call_operand.vmem [shape: f32[8,16], index: 3, kind: input, shape index: {}]
  %s4 = inlined_call_operand.vmem [shape: f32[8,1], index: 4, kind: input, shape index: {}]
  %s5 = inlined_call_operand.vmem [shape: f32[2,25,256], index: 5, kind: output, shape index: {0}]
  %s6 = inlined_call_operand.hbm [shape: f32[2,8,256], index: 6, kind: output, shape index: {1}]
  %7 = xla_tuple %s5, %s6
  %s8 = sld [smem:[#allocation0]]
  $region61: #{tpu_custom_call.1} parent=0
    _
  %s10 = ssub.s32 1, %s8
  %s11 = scalar_select 0, %s10, %s8
  $region1: #{tpu_custom_call.1} parent=0
    #allocation2 [shape = 'u8[16384]{0}', space=vmem, size = 0x4000, scoped, tag = 'output window, operand 1']
    #allocation3 [shape = 's32[2]{0}', space=sflag, size = 0x8, scoped, tag = 'scoped memory for tpu_custom_call.1']
    %12 = vsyncpa [#allocation3], 0
    %s13 = scalar_lea.sflag [#allocation3], 1
    %14 = vsyncpa %s13, 0
    loop: start=0, step=1, limit=4
    $region2: #{tpu_custom_call.1} parent=1 // loop_pre_header
      _
    $region3: #{tpu_custom_call.1} parent=1 // loop_header
      %s16 = sphi 0, %s20
      %p17 = scmp.ge.s32.totalorder %s16, 4
      %s23 = sphi 0, %s35
      %s24 = sphi 0, %s31
      %s25 = sphi 0, %s23
      %s26 = sphi 0, %s24
      %s27 = sphi 0, %s25
      %s28 = sphi 0, %s26
      %s40 = sphi 0, %s42
      %s43 = sphi 0, %s40
      %s44 = sphi 0, %s43
      %s60 = sphi 0, %s44
      %s64 = sphi 0, %s64
      %s66 = sphi 0, %s64
      %s67 = sphi 0, %s66
      %s81 = sphi 0, %s67
      %s85 = sphi 0, %s85
      %s87 = sphi 0, %s85
      %s88 = sphi 0, %s87
      %s102 = sphi 0, %s88
      %s106 = sphi 0, %s106
      %s108 = sphi 0, %s106
      %s109 = sphi 0, %s108
      %s123 = sphi 0, %s109
      %s127 = sphi 0, %s127
      %s129 = sphi 0, %s127
      %s130 = sphi 0, %s129
      %s144 = sphi 0, %s130
      %s152 = sphi 0, %s154
      %s155 = sphi 0, %s152
      %s156 = sphi 0, %s155
      %s172 = sphi 0, %s156
      %s180 = sphi 0, %s182
      %s183 = sphi 0, %s180
      %s184 = sphi 0, %s183
      %s200 = sphi 0, %s184
    $region4: #{tpu_custom_call.1} parent=1 // loop_header_branch
      %19 = sbr.rel (%p17) target = $region8
    $region5: #{tpu_custom_call.1} parent=1 // loop_body
      %s21 = ssub.s32 %s16, 1
      %s22 = ssub.s32 %s16, 2
      %s29 = sadd.s32 1, %s24
      %p30 = scmp.ge.s32.totalorder %s29, 1
      %s31 = scalar_select %p30, 0, %s29
      %s32 = sadd.s32 1, %s23
      %s33 = scalar_select %p30, %s32, %s23
      %p34 = scmp.ge.s32.totalorder %s33, 2
      %s35 = scalar_select %p34, 0, %s33
      %s36 = ssub.s32 %s23, %s35
      %s37 = ssub.s32 %s24, %s31
      %s38 = sor.u32 %s36, %s37
      %p39 = scmp.eq.s32.totalorder %s38, 0
      %s41 = sadd.s32 %s40, 1
      %s42 = scalar_select %p39, %s40, %s41
      %p45 = pneg %p39
      %p46 = scmp.eq.s32.totalorder %s16, 1
      %p47 = por %p45, %p46
      %p48 = scmp.ne.s32.totalorder %s40, %s43
      %p49 = scmp.eq.s32.totalorder %s16, 0
      %p50 = por %p48, %p49
      %p51 = scmp.ne.s32.totalorder %s40, %s43
      %p52 = scmp.eq.s32.totalorder %s21, 1
      %p53 = por %p51, %p52
      %p54 = scmp.ne.s32.totalorder %s43, %s44
      %p55 = scmp.eq.s32.totalorder %s21, 0
      %p56 = por %p54, %p55
      %p57 = scmp.ne.s32.totalorder %s43, %s44
      %p58 = scmp.eq.s32.totalorder %s22, 1
      %p59 = por %p57, %p58
      %p61 = scmp.ne.s32.totalorder %s44, %s60
      %p62 = scmp.eq.s32.totalorder %s22, 0
      %p63 = por %p61, %p62
      %s65 = sadd.s32 %s64, 1
      %p68 = scmp.eq.s32.totalorder %s16, 1
      %p69 = scmp.ne.s32.totalorder %s64, %s66
      %p70 = scmp.eq.s32.totalorder %s16, 0
      %p71 = por %p69, %p70
      %p72 = scmp.ne.s32.totalorder %s64, %s66
      %p73 = scmp.eq.s32.totalorder %s21, 1
      %p74 = por %p72, %p73
      %p75 = scmp.ne.s32.totalorder %s66, %s67
      %p76 = scmp.eq.s32.totalorder %s21, 0
      %p77 = por %p75, %p76
      %p78 = scmp.ne.s32.totalorder %s66, %s67
      %p79 = scmp.eq.s32.totalorder %s22, 1
      %p80 = por %p78, %p79
      %p82 = scmp.ne.s32.totalorder %s67, %s81
      %p83 = scmp.eq.s32.totalorder %s22, 0
      %p84 = por %p82, %p83
      %s86 = sadd.s32 %s85, 1
      %p89 = scmp.eq.s32.totalorder %s16, 1
      %p90 = scmp.ne.s32.totalorder %s85, %s87
      %p91 = scmp.eq.s32.totalorder %s16, 0
      %p92 = por %p90, %p91
      %p93 = scmp.ne.s32.totalorder %s85, %s87
      %p94 = scmp.eq.s32.totalorder %s21, 1
      %p95 = por %p93, %p94
      %p96 = scmp.ne.s32.totalorder %s87, %s88
      %p97 = scmp.eq.s32.totalorder %s21, 0
      %p98 = por %p96, %p97
      %p99 = scmp.ne.s32.totalorder %s87, %s88
      %p100 = scmp.eq.s32.totalorder %s22, 1
      %p101 = por %p99, %p100
      %p103 = scmp.ne.s32.totalorder %s88, %s102
      %p104 = scmp.eq.s32.totalorder %s22, 0
      %p105 = por %p103, %p104
      %s107 = sadd.s32 %s106, 1
      %p110 = scmp.eq.s32.totalorder %s16, 1
      %p111 = scmp.ne.s32.totalorder %s106, %s108
      %p112 = scmp.eq.s32.totalorder %s16, 0
      %p113 = por %p111, %p112
      %p114 = scmp.ne.s32.totalorder %s106, %s108
      %p115 = scmp.eq.s32.totalorder %s21, 1
      %p116 = por %p114, %p115
      %p117 = scmp.ne.s32.totalorder %s108, %s109
      %p118 = scmp.eq.s32.totalorder %s21, 0
      %p119 = por %p117, %p118
      %p120 = scmp.ne.s32.totalorder %s108, %s109
      %p121 = scmp.eq.s32.totalorder %s22, 1
      %p122 = por %p120, %p121
      %p124 = scmp.ne.s32.totalorder %s109, %s123
      %p125 = scmp.eq.s32.totalorder %s22, 0
      %p126 = por %p124, %p125
      %s128 = sadd.s32 %s127, 1
      %p131 = scmp.eq.s32.totalorder %s16, 1
      %p132 = scmp.ne.s32.totalorder %s127, %s129
      %p133 = scmp.eq.s32.totalorder %s16, 0
      %p134 = por %p132, %p133
      %p135 = scmp.ne.s32.totalorder %s127, %s129
      %p136 = scmp.eq.s32.totalorder %s21, 1
      %p137 = por %p135, %p136
      %p138 = scmp.ne.s32.totalorder %s129, %s130
      %p139 = scmp.eq.s32.totalorder %s21, 0
      %p140 = por %p138, %p139
      %p141 = scmp.ne.s32.totalorder %s129, %s130
      %p142 = scmp.eq.s32.totalorder %s22, 1
      %p143 = por %p141, %p142
      %p145 = scmp.ne.s32.totalorder %s130, %s144
      %p146 = scmp.eq.s32.totalorder %s22, 0
      %p147 = por %p145, %p146
      %s148 = ssub.s32 %s23, %s35
      %s149 = ssub.s32 %s24, %s31
      %s150 = sor.u32 %s148, %s149
      %p151 = scmp.eq.s32.totalorder %s150, 0
      %s153 = sadd.s32 %s152, 1
      %s154 = scalar_select %p151, %s152, %s153
      %p157 = pneg %p151
      %p158 = scmp.eq.s32.totalorder %s16, 1
      %p159 = por %p157, %p158
      %p160 = scmp.ne.s32.totalorder %s152, %s155
      %p161 = scmp.eq.s32.totalorder %s16, 0
      %p162 = por %p160, %p161
      %p163 = scmp.ne.s32.totalorder %s152, %s155
      %p164 = scmp.eq.s32.totalorder %s21, 1
      %p165 = por %p163, %p164
      %p166 = scmp.ne.s32.totalorder %s155, %s156
      %p167 = scmp.eq.s32.totalorder %s21, 0
      %p168 = por %p166, %p167
      %p169 = scmp.ne.s32.totalorder %s155, %s156
      %p170 = scmp.eq.s32.totalorder %s22, 1
      %p171 = por %p169, %p170
      %p173 = scmp.ne.s32.totalorder %s156, %s172
      %p174 = scmp.eq.s32.totalorder %s22, 0
      %p175 = por %p173, %p174
      %s176 = ssub.s32 %s23, %s35
      %s177 = ssub.s32 %s24, %s31
      %s178 = sor.u32 %s176, %s177
      %p179 = scmp.eq.s32.totalorder %s178, 0
      %s181 = sadd.s32 %s180, 1
      %s182 = scalar_select %p179, %s180, %s181
      %p185 = pneg %p179
      %p186 = scmp.eq.s32.totalorder %s16, 1
      %p187 = por %p185, %p186
      %p188 = scmp.ne.s32.totalorder %s180, %s183
      %p189 = scmp.eq.s32.totalorder %s16, 0
      %p190 = por %p188, %p189
      %p191 = scmp.ne.s32.totalorder %s180, %s183
      %p192 = scmp.eq.s32.totalorder %s21, 1
      %p193 = por %p191, %p192
      %p194 = scmp.ne.s32.totalorder %s183, %s184
      %p195 = scmp.eq.s32.totalorder %s21, 0
      %p196 = por %p194, %p195
      %p197 = scmp.ne.s32.totalorder %s183, %s184
      %p198 = scmp.eq.s32.totalorder %s22, 1
      %p199 = por %p197, %p198
      %p201 = scmp.ne.s32.totalorder %s184, %s200
      %p202 = scmp.eq.s32.totalorder %s22, 0
      %p203 = por %p201, %p202
      %p204 = scmp.le.s32.totalorder 1, %s16
      %p205 = scmp.lt.s32.totalorder %s16, 3
      %p206 = pnand %p204, %p205
      %p207 = pneg %p206
      // Predicated region
      $region9: #{tpu_custom_call.1} parent=5 // pred_check
        _
      $region10: #{tpu_custom_call.1} parent=5 // pred_check_branch
        %209 = sbr.rel (%p206) target = $region12
      $region11: #{tpu_custom_call.1} parent=5 // pred_region
        %s210 = ssub.s32 %s16, 1
        // Predicated region
        $region13: #{tpu_custom_call.1} parent=11 // pred_check
          %p211 = pneg %p77
        $region14: #{tpu_custom_call.1} parent=11 // pred_check_branch
          %213 = sbr.rel (%p211) target = $region16
        $region15: #{tpu_custom_call.1} parent=11 // pred_region
          _
        $region16: #{tpu_custom_call.1} parent=11 // pred_fallthru
          _
        // Predicated region
        $region17: #{tpu_custom_call.1} parent=11 // pred_check
          %p214 = pneg %p98
        $region18: #{tpu_custom_call.1} parent=11 // pred_check_branch
          %216 = sbr.rel (%p214) target = $region20
        $region19: #{tpu_custom_call.1} parent=11 // pred_region
          _
        $region20: #{tpu_custom_call.1} parent=11 // pred_fallthru
          _
        // Predicated region
        $region21: #{tpu_custom_call.1} parent=11 // pred_check
          %p217 = pneg %p119
        $region22: #{tpu_custom_call.1} parent=11 // pred_check_branch
          %219 = sbr.rel (%p217) target = $region24
        $region23: #{tpu_custom_call.1} parent=11 // pred_region
          _
        $region24: #{tpu_custom_call.1} parent=11 // pred_fallthru
          _
        // Predicated region
        $region25: #{tpu_custom_call.1} parent=11 // pred_check
          %p220 = pneg %p140
        $region26: #{tpu_custom_call.1} parent=11 // pred_check_branch
          %222 = sbr.rel (%p220) target = $region28
        $region27: #{tpu_custom_call.1} parent=11 // pred_region
          _
        $region28: #{tpu_custom_call.1} parent=11 // pred_fallthru
          _
      $region12: #{tpu_custom_call.1} parent=5 // pred_fallthru
        _
      %p223 = scmp.lt.s32.totalorder %s16, 2
      // Predicated region
      $region29: #{tpu_custom_call.1} parent=5 // pred_check
        %p224 = pneg %p223
      $region30: #{tpu_custom_call.1} parent=5 // pred_check_branch
        %226 = sbr.rel (%p224) target = $region32
      $region31: #{tpu_custom_call.1} parent=5 // pred_region
        // Predicated region
        $region33: #{tpu_custom_call.1} parent=31 // pred_check
          %p227 = pneg %p50
        $region34: #{tpu_custom_call.1} parent=31 // pred_check_branch
          %229 = sbr.rel (%p227) target = $region36
        $region35: #{tpu_custom_call.1} parent=31 // pred_region
          %s230 = smul.u32 2, %s24
          %p231 = scmp.lt.s32.totalorder %s23, 1
          %s232 = scalar_select %p231, %s23, 1
          %p233 = scmp.lt.s32.totalorder %s230, 1
          %s234 = scalar_select %p233, %s230, 1
          %s235 = smul.addr %s232, 4
          %s236 = sadd.s32 %s234, %s235
          %s237 = smul.addr %s236, 8
          %s238 = scalar_lea.vmem %s0, %s237
          %s239 = smul.u32 2, %s24
        $region36: #{tpu_custom_call.1} parent=31 // pred_fallthru
          _
      $region32: #{tpu_custom_call.1} parent=5 // pred_fallthru
        _
      %p240 = scmp.le.s32.totalorder 1, %s16
      %p241 = scmp.lt.s32.totalorder %s16, 3
      %p242 = pnand %p240, %p241
      %p243 = pneg %p242
      // Predicated region
      $region37: #{tpu_custom_call.1} parent=5 // pred_check
        _
      $region38: #{tpu_custom_call.1} parent=5 // pred_check_branch
        %245 = sbr.rel (%p242) target = $region40
      $region39: #{tpu_custom_call.1} parent=5 // pred_region
        %s246 = ssub.s32 %s16, 1
        %s247 = smul.u32 2, %s26
        %p248 = scmp.lt.s32.totalorder %s25, 1
        %s249 = scalar_select %p248, %s25, 1
        %p250 = scmp.lt.s32.totalorder %s247, 1
        %s251 = scalar_select %p250, %s247, 1
        %s252 = smul.addr %s249, 4
        %s253 = sadd.s32 %s251, %s252
        %s254 = smul.addr %s253, 8
        %s255 = scalar_lea.vmem %s0, %s254
        %p256 = pneg %p56
        %p257 = pneg %p53
        %p258 = pneg %p77
        %p259 = pneg %p74
        %p260 = pneg %p98
        %p261 = pneg %p95
        %p262 = pneg %p119
        %p263 = pneg %p116
        %p264 = pneg %p140
        %p265 = pneg %p137
        %p266 = pneg %p168
        %p267 = pneg %p165
        %s268 = smul.u32 2, %s26
        %p269 = scmp.lt.s32.totalorder %s25, 1
        %s270 = scalar_select %p269, %s25, 1
        %p271 = scmp.lt.s32.totalorder %s268, 1
        %s272 = scalar_select %p271, %s268, 1
        %s273 = smul.addr %s270, 8
        %s274 = sadd.s32 %s272, %s273
        %s275 = smul.addr %s274, 8
        %s276 = scalar_lea.vmem %s5, %s275
        %p277 = pneg %p196
        %p278 = pneg %p193
        %s279 = sand.u32 %s183, 1
        %s280 = scalar_lea.sflag [#allocation3], %s279
        %s281 = sand.u32 %s183, 1
        %s282 = smul.addr %s281, 16
        %s283 = scalar_lea.vmem [#allocation2], %s282
        %s284 = smul.u32 2, %s26
        %p285 = scmp.lt.s32.totalorder %s25, 1
        %s286 = scalar_select %p285, %s25, 1
        %p287 = scmp.lt.s32.totalorder %s284, 1
        %s288 = scalar_select %p287, %s284, 1
        %s289 = smul.addr %s286, 4
        %s290 = sadd.s32 %s288, %s289
        %s291 = smul.addr %s290, 8
        %s292 = scalar_lea.vmem %s0, %s291
        %s293 = smul.u32 2, %s26
        %s294 = smul.u32 2, %s26
        %p295 = scmp.lt.s32.totalorder %s25, 1
        %s296 = scalar_select %p295, %s25, 1
        %p297 = scmp.lt.s32.totalorder %s294, 1
        %s298 = scalar_select %p297, %s294, 1
        %s299 = smul.addr %s296, 8
        %s300 = sadd.s32 %s298, %s299
        %s301 = smul.addr %s300, 8
        %s302 = scalar_lea.vmem %s5, %s301
        %s303 = smul.u32 2, %s26
        %s304 = smul.u32 2, %s26
        %v305 = vld [vmem:[%s292] sm:$0xff]
        %v306 = vld [vmem:[%s292 + $0x8] sm:$0xff]
        %v307 = vld [vmem:[%s292 + $0x10] sm:$0xff]
        %v308 = vld [vmem:[%s292 + $0x18] sm:$0xff]
        %v309 = vld [vmem:[%s1] sm:$0xff]
        %v310 = vld [vmem:[%s1 + $0x8] sm:$0xff]
        %v311 = vld [vmem:[%s1 + $0x10] sm:$0xff]
        %v312 = vld [vmem:[%s1 + $0x18] sm:$0x1]
        %v313 = vld [vmem:[%s2] sm:$0xff]
        %v314 = vld [vmem:[%s2 + $0x8] sm:$0xff]
        %v315 = vld [vmem:[%s2 + $0x10] sm:$0xff]
        %v316 = vld [vmem:[%s2 + $0x18] sm:$0x1]
        %318 = vset.pattern.permute.xlu0 0
        %319 = vperm.xlu0 %318, %v313
        %v320 = vpop.permute.xlu0 %319
        %323 = vset.pattern.permute.xlu0 0
        %324 = vperm.xlu0 %323, %v314
        %v325 = vpop.permute.xlu0 %324
        %328 = vset.pattern.permute.xlu0 0
        %329 = vperm.xlu0 %328, %v315
        %v330 = vpop.permute.xlu0 %329
        %333 = vset.pattern.permute.xlu0 0
        %334 = vperm.xlu0 %333, %v316
        %v335 = vpop.permute.xlu0 %334
        %vm337 = vcmask 130048
        %v339 = vsel %vm337, %v309, 0
        %v342 = vsel %vm337, %v310, 0
        %v345 = vsel %vm337, %v311, 0
        %v348 = vsel %vm337, %v312, 0
        %350 = vmatpush.msra.mxu0 0.0
        %351 = vmatpush.msra.mxu0 0.0
        %352 = vmatpush.msra.mxu0 0.0
        %353 = vmatpush.msra.mxu0 0.0
        %354 = vmatpush.msra.mxu0 0.0
        %355 = vmatpush.msra.mxu0 0.0
        %356 = vmatpush.msra.mxu0 0.0
        %357 = vmatpush.msra.mxu0 0.0
        %358 = vmatpush.msra.mxu0 0.0
        %359 = vmatpush.msra.mxu0 0.0
        %360 = vmatpush.msra.mxu0 0.0
        %361 = vmatpush.msra.mxu0 0.0
        %362 = vmatpush.msra.mxu0 0.0
        %363 = vmatpush.msra.mxu0 0.0
        %364 = vmatpush.msra.mxu0 %v307
        %365 = vmatpush.msra.mxu0 %v305
        %366 = vmatmul.f32.gmra.mxu0 %v339
        %v367 = vpop.f32.mrf.mxu0
        %v368 = vadd.f32 %v320, %v367
        %369 = vmatmul.f32.gmra.mxu0 %v342
        %v370 = vpop.f32.mrf.mxu0
        %v371 = vadd.f32 %v325, %v370
        %372 = vmatmul.f32.gmra.mxu0 %v345
        %v373 = vpop.f32.mrf.mxu0
        %v374 = vadd.f32 %v330, %v373
        %375 = vmatmul.f32.gmra.mxu0 %v348
        %v376 = vpop.f32.mrf.mxu0
        %v377 = vadd.f32 %v335, %v376
        %378 = vdwg.mxu0
        %379 = vmatpush.msra.mxu0 0.0
        %380 = vmatpush.msra.mxu0 0.0
        %381 = vmatpush.msra.mxu0 0.0
        %382 = vmatpush.msra.mxu0 0.0
        %383 = vmatpush.msra.mxu0 0.0
        %384 = vmatpush.msra.mxu0 0.0
        %385 = vmatpush.msra.mxu0 0.0
        %386 = vmatpush.msra.mxu0 0.0
        %387 = vmatpush.msra.mxu0 0.0
        %388 = vmatpush.msra.mxu0 0.0
        %389 = vmatpush.msra.mxu0 0.0
        %390 = vmatpush.msra.mxu0 0.0
        %391 = vmatpush.msra.mxu0 0.0
        %392 = vmatpush.msra.mxu0 0.0
        %393 = vmatpush.msra.mxu0 %v308
        %394 = vmatpush.msra.mxu0 %v306
        %395 = vmatmul.f32.gmra.mxu0 %v339
        %v396 = vpop.f32.mrf.mxu0
        %v397 = vadd.f32 %v320, %v396
        %398 = vmatmul.f32.gmra.mxu0 %v342
        %v399 = vpop.f32.mrf.mxu0
        %v400 = vadd.f32 %v325, %v399
        %401 = vmatmul.f32.gmra.mxu0 %v345
        %v402 = vpop.f32.mrf.mxu0
        %v403 = vadd.f32 %v330, %v402
        %404 = vmatmul.f32.gmra.mxu0 %v348
        %v405 = vpop.f32.mrf.mxu0
        %v406 = vadd.f32 %v335, %v405
        %407 = vdwg.mxu0
        %v408 = vld [vmem:[%s3] sm:$0xff]
        %v409 = vld [vmem:[%s4] sm:$0xff]
        %411 = vset.pattern.permute.xlu0 0
        %412 = vperm.xlu0 %411, %v409
        %v413 = vpop.permute.xlu0 %412
        %v416 = vsel %vm337, %v408, 0
        %418 = vmatpush.msra.mxu0 0.0
        %419 = vmatpush.msra.mxu0 0.0
        %420 = vmatpush.msra.mxu0 0.0
        %421 = vmatpush.msra.mxu0 0.0
        %422 = vmatpush.msra.mxu0 0.0
        %423 = vmatpush.msra.mxu0 0.0
        %424 = vmatpush.msra.mxu0 0.0
        %425 = vmatpush.msra.mxu0 0.0
        %426 = vmatpush.msra.mxu0 0.0
        %427 = vmatpush.msra.mxu0 0.0
        %428 = vmatpush.msra.mxu0 0.0
        %429 = vmatpush.msra.mxu0 0.0
        %430 = vmatpush.msra.mxu0 0.0
        %431 = vmatpush.msra.mxu0 0.0
        %432 = vmatpush.msra.mxu0 %v307
        %433 = vmatpush.msra.mxu0 %v305
        %434 = vmatmul.f32.gmra.mxu0 %v416
        %v435 = vpop.f32.mrf.mxu0
        %v436 = vadd.f32 %v413, %v435
        %437 = vdwg.mxu0
        %438 = vmatpush.msra.mxu0 0.0
        %439 = vmatpush.msra.mxu0 0.0
        %440 = vmatpush.msra.mxu0 0.0
        %441 = vmatpush.msra.mxu0 0.0
        %442 = vmatpush.msra.mxu0 0.0
        %443 = vmatpush.msra.mxu0 0.0
        %444 = vmatpush.msra.mxu0 0.0
        %445 = vmatpush.msra.mxu0 0.0
        %446 = vmatpush.msra.mxu0 0.0
        %447 = vmatpush.msra.mxu0 0.0
        %448 = vmatpush.msra.mxu0 0.0
        %449 = vmatpush.msra.mxu0 0.0
        %450 = vmatpush.msra.mxu0 0.0
        %451 = vmatpush.msra.mxu0 0.0
        %452 = vmatpush.msra.mxu0 %v308
        %453 = vmatpush.msra.mxu0 %v306
        %454 = vmatmul.f32.gmra.mxu0 %v416
        %v455 = vpop.f32.mrf.mxu0
        %v456 = vadd.f32 %v413, %v455
        %457 = vdwg.mxu0
        %458 = vst [vmem:[%s302] sm:$0xff] %v368
        %459 = vst [vmem:[%s302 + $0x8] sm:$0xff] %v397
        %460 = vst [vmem:[%s302 + $0x10] sm:$0xff] %v371
        %461 = vst [vmem:[%s302 + $0x18] sm:$0xff] %v400
        %462 = vst [vmem:[%s302 + $0x20] sm:$0xff] %v374
        %463 = vst [vmem:[%s302 + $0x28] sm:$0xff] %v403
        %464 = vst [vmem:[%s302 + $0x30] sm:$0x1] %v377
        %465 = vst [vmem:[%s302 + $0x38] sm:$0x1] %v406
        %466 = vst [vmem:[%s283] sm:$0xff] %v436
        %467 = vst [vmem:[%s283 + $0x8] sm:$0xff] %v456
        %s468 = smul.u32 2, %s26
        %p469 = scmp.lt.s32.totalorder %s25, 1
        %s470 = scalar_select %p469, %s25, 1
        %p471 = scmp.lt.s32.totalorder %s468, 1
        %s472 = scalar_select %p471, %s468, 1
        %s473 = smul.addr %s470, 8
        %s474 = sadd.s32 %s472, %s473
        %s475 = smul.addr %s474, 8
        %s476 = scalar_lea.vmem %s5, %s475
        %s477 = sand.u32 %s183, 1
        %s478 = scalar_lea.sflag [#allocation3], %s477
        %s479 = sand.u32 %s183, 1
        %s480 = smul.addr %s479, 16
        %s481 = scalar_lea.vmem [#allocation2], %s480
        // Predicated region
        $region41: #{tpu_custom_call.1} parent=39 // pred_check
          %p482 = pneg %p165
        $region42: #{tpu_custom_call.1} parent=39 // pred_check_branch
          %484 = sbr.rel (%p482) target = $region44
        $region43: #{tpu_custom_call.1} parent=39 // pred_region
          %s485 = smul.u32 2, %s26
        $region44: #{tpu_custom_call.1} parent=39 // pred_fallthru
          _
        // Predicated region
        $region45: #{tpu_custom_call.1} parent=39 // pred_check
          %p486 = pneg %p193
        $region46: #{tpu_custom_call.1} parent=39 // pred_check_branch
          %488 = sbr.rel (%p486) target = $region48
        $region47: #{tpu_custom_call.1} parent=39 // pred_region
          %s489 = smul.u32 2, %s26
          %491 = vsyncadd %s478, 0
          %s492 = smul.addr %s25, 2
          %s493 = sadd.s32 %s489, %s492
          %s494 = smul.addr %s493, 8
          %s495 = scalar_lea.hbm %s6, %s494
          %s497 = sshll.u32 %s481, 4
          %s498 = int_to_ptr.vmem [resolvable:$true] %s497
          %s499 = sshll.u32 %s495, 4
          %s500 = int_to_ptr.hbm [resolvable:$true] %s499
          %502 = dma.vmem_to_hbm [thread:$0]  %s498, 256, %s500, %s478
        $region48: #{tpu_custom_call.1} parent=39 // pred_fallthru
          _
      $region40: #{tpu_custom_call.1} parent=5 // pred_fallthru
        _
      %p503 = scmp.le.s32.totalorder 2, %s16
      // Predicated region
      $region49: #{tpu_custom_call.1} parent=5 // pred_check
        %p504 = pneg %p503
      $region50: #{tpu_custom_call.1} parent=5 // pred_check_branch
        %506 = sbr.rel (%p504) target = $region52
      $region51: #{tpu_custom_call.1} parent=5 // pred_region
        %s507 = ssub.s32 %s16, 2
        // Predicated region
        $region53: #{tpu_custom_call.1} parent=51 // pred_check
          %p508 = pneg %p171
        $region54: #{tpu_custom_call.1} parent=51 // pred_check_branch
          %510 = sbr.rel (%p508) target = $region56
        $region55: #{tpu_custom_call.1} parent=51 // pred_region
          %s511 = smul.u32 2, %s28
          %p512 = scmp.lt.s32.totalorder %s27, 1
          %s513 = scalar_select %p512, %s27, 1
          %p514 = scmp.lt.s32.totalorder %s511, 1
          %s515 = scalar_select %p514, %s511, 1
          %s516 = smul.addr %s513, 8
          %s517 = sadd.s32 %s515, %s516
          %s518 = smul.addr %s517, 8
          %s519 = scalar_lea.vmem %s5, %s518
        $region56: #{tpu_custom_call.1} parent=51 // pred_fallthru
          _
        // Predicated region
        $region57: #{tpu_custom_call.1} parent=51 // pred_check
          %p520 = pneg %p199
        $region58: #{tpu_custom_call.1} parent=51 // pred_check_branch
          %522 = sbr.rel (%p520) target = $region60
        $region59: #{tpu_custom_call.1} parent=51 // pred_region
          %s523 = sand.u32 %s184, 1
          %s524 = scalar_lea.sflag [#allocation3], %s523
          %s525 = sand.u32 %s184, 1
          %s526 = smul.addr %s525, 16
          %s527 = scalar_lea.vmem [#allocation2], %s526
          %529 = dma.done %s524, 256
        $region60: #{tpu_custom_call.1} parent=51 // pred_fallthru
          _
      $region52: #{tpu_custom_call.1} parent=5 // pred_fallthru
        _
    $region6: #{tpu_custom_call.1} parent=1 // loop_footer
      %s20 = sadd.s32 1, %s16
    $region7: #{tpu_custom_call.1} parent=1 // loop_footer_branch
      %15 = sbr.rel target = $region3
    $region8: #{tpu_custom_call.1} parent=1 // loop_exit
      _
    %530 = vsyncpa [#allocation3], 1
    %s531 = scalar_lea.sflag [#allocation3], 1
    %532 = vsyncpa %s531, 1

</llo_original>
